<compile_context>
chip_gen: v5e
topology: v5e:2x2
jax: 0.10.0
libtpu: 0.0.40
codegen_flags: <defaults>
</compile_context>

<pallas_src>
import jax
import jax.numpy as jnp
from jax.experimental import pallas as pl
from jax.experimental.pallas import tpu as pltpu


def _round_up(n, m):
    return ((n + m - 1) // m) * m


def _policy_mlp_kernel(x_ref, w1_ref, b1_ref, w2_ref, b2_ref, w3t_ref, b3t_ref,
                       o_ref):
    # x tile: (TILE_B, IN) f32 -> cast to bf16 in-kernel (free VALU filler).
    x = x_ref[...].astype(jnp.bfloat16)

    # fc1 + ReLU  (bf16 MXU operands, f32 accumulation / elementwise)
    h1 = jnp.dot(x, w1_ref[...], preferred_element_type=jnp.float32) + b1_ref[...]
    h1 = jnp.maximum(h1, 0.0)

    # fc2 + ReLU
    h2 = jnp.dot(h1.astype(jnp.bfloat16), w2_ref[...],
                 preferred_element_type=jnp.float32) + b2_ref[...]
    h2 = jnp.maximum(h2, 0.0)

    # fc3 computed transposed: (OUT_SUB, H) contracted with (TILE_B, H) along H
    # -> logits_t of shape (OUT_SUB, TILE_B): batch ends up on the lane axis.
    logits_t = jax.lax.dot_general(
        w3t_ref[...], h2.astype(jnp.bfloat16),
        dimension_numbers=(((1,), (1,)), ((), ())),
        preferred_element_type=jnp.float32,
    ) + b3t_ref[...]
    # Padded action rows carry a -1e30 bias (baked in at prep time), so their
    # exp() underflows to exactly 0 and they never affect the softmax.

    # Numerically-stable softmax over the (8) sublane axis; EUP reciprocal.
    m = jnp.max(logits_t, axis=0, keepdims=True)
    e = jnp.exp(logits_t - m)
    inv = pl.reciprocal(jnp.sum(e, axis=0, keepdims=True), approx=True)
    o_ref[...] = e * inv        # lane-dense (OUT_SUB, TILE_B) f32 store


def prepare_params(params):
    """One-time pad / cast / transpose of parameters into kernel layout.

    Call once at init and cache the result -- do NOT call per forward step.
    """
    w1, b1 = params["w1"], params["b1"]
    w2, b2 = params["w2"], params["b2"]
    w3, b3 = params["w3"], params["b3"]

    in_dim, hid = w1.shape
    out_dim = w3.shape[1]
    H_PAD = _round_up(hid, 128)
    OUT_SUB = _round_up(out_dim, 8)

    w1p = jnp.zeros((in_dim, H_PAD), jnp.bfloat16).at[:, :hid].set(w1.astype(jnp.bfloat16))
    b1p = jnp.zeros((1, H_PAD), jnp.float32).at[:, :hid].set(
        jnp.reshape(b1, (1, hid)).astype(jnp.float32))
    w2p = jnp.zeros((H_PAD, H_PAD), jnp.bfloat16).at[:hid, :hid].set(w2.astype(jnp.bfloat16))
    b2p = jnp.zeros((1, H_PAD), jnp.float32).at[:, :hid].set(
        jnp.reshape(b2, (1, hid)).astype(jnp.float32))
    # fc3 pre-transposed to (OUT_SUB, H_PAD); padded rows masked via -1e30 bias.
    w3tp = jnp.zeros((OUT_SUB, H_PAD), jnp.bfloat16).at[:out_dim, :hid].set(
        w3.T.astype(jnp.bfloat16))
    b3tp = jnp.full((OUT_SUB, 1), -1e30, jnp.float32).at[:out_dim, 0].set(
        jnp.reshape(b3, (out_dim,)).astype(jnp.float32))

    return {"w1": w1p, "b1": b1p, "w2": w2p, "b2": b2p,
            "w3t": w3tp, "b3t": b3tp, "out_dim": out_dim, "in_dim": in_dim}


def _choose_tiles(batch, max_tile_b):
    """Batch tiling: TILE_B multiple of 128 (output lane axis), minimal padding,
    >=2 grid steps when possible (megacore sharding on v7x), tiles <= max_tile_b."""
    n_chunks = pl.cdiv(batch, 128)                       # 128-row units
    n_tiles = max(pl.cdiv(n_chunks * 128, max_tile_b),   # respect per-tile cap
                  2 if n_chunks >= 2 else 1)             # >=2 steps when possible
    chunks_per_tile = pl.cdiv(n_chunks, n_tiles)
    tile_b = chunks_per_tile * 128
    n_tiles = pl.cdiv(n_chunks, chunks_per_tile)
    return tile_b, n_tiles, tile_b * n_tiles


def policy_network_forward(x, prepped, *, max_tile_b=2048):
    """x: (B, input_size) float32; prepped: output of prepare_params()."""
    w1, b1 = prepped["w1"], prepped["b1"]
    w2, b2 = prepped["w2"], prepped["b2"]
    w3t, b3t = prepped["w3t"], prepped["b3t"]
    out_dim = prepped["out_dim"]

    B, in_dim = x.shape
    assert in_dim == w1.shape[0], "input feature dim mismatch with prepared params"
    H_PAD = w1.shape[1]
    OUT_SUB = w3t.shape[0]

    TILE_B, n_tiles, B_PAD = _choose_tiles(B, max_tile_b)

    x = x.astype(jnp.float32)                 # no-op when already f32
    if B_PAD != B:                            # pad batch only when needed
        x = jnp.pad(x, ((0, B_PAD - B), (0, 0)))

    const = lambda i: (0, 0)   # weights/biases: same block every step -> VMEM-resident

    out_t = pl.pallas_call(
        _policy_mlp_kernel,
        out_shape=jax.ShapeDtypeStruct((OUT_SUB, B_PAD), jnp.float32),
        grid=(n_tiles,),
        in_specs=[
            # activations: streamed over the batch grid (auto double-buffered)
            pl.BlockSpec((TILE_B, in_dim), lambda i: (i, 0)),
            # weights / biases: constant index maps (fetched once)
            pl.BlockSpec((in_dim, H_PAD), const),
            pl.BlockSpec((1, H_PAD), const),
            pl.BlockSpec((H_PAD, H_PAD), const),
            pl.BlockSpec((1, H_PAD), const),
            pl.BlockSpec((OUT_SUB, H_PAD), const),
            pl.BlockSpec((OUT_SUB, 1), const),
        ],
        # transposed, lane-dense output: batch on the lane axis
        out_specs=pl.BlockSpec((OUT_SUB, TILE_B), lambda i: (0, i)),
        compiler_params=pltpu.CompilerParams(
            dimension_semantics=("parallel",)),   # shard batch tiles across TCs
    )(x, w1, b1, w2, b2, w3t, b3t)

    # (OUT_SUB, B_PAD) -> logical (B, out_dim); tiny transpose in the wrapper.
    return out_t[:out_dim, :B].T


def policy_network_reference(x, params):
    """Pure-JAX f32 reference matching the PyTorch module."""
    h1 = jnp.maximum(x @ params["w1"] + params["b1"], 0.0)
    h2 = jnp.maximum(h1 @ params["w2"] + params["b2"], 0.0)
    return jax.nn.softmax(h2 @ params["w3"] + params["b3"], axis=-1)


def init_params(key, input_size, hidden_size=64):
    """Deterministic init mimicking nn.Linear default (uniform +/- 1/sqrt(fan_in))."""
    ks = jax.random.split(key, 6)

    def linear(kw, kb, fan_in, fan_out):
        bound = 1.0 / jnp.sqrt(jnp.float32(fan_in))
        w = jax.random.uniform(kw, (fan_in, fan_out), jnp.float32, -bound, bound)
        b = jax.random.uniform(kb, (1, fan_out), jnp.float32, -bound, bound)
        return w, b

    w1, b1 = linear(ks[0], ks[1], input_size, hidden_size)
    w2, b2 = linear(ks[2], ks[3], hidden_size, hidden_size)
    w3, b3 = linear(ks[4], ks[5], hidden_size, 3)
    return {"w1": w1, "b1": b1, "w2": w2, "b2": b2, "w3": w3, "b3": b3}


if __name__ == "__main__":
    key = jax.random.PRNGKey(0)
    k_x, k_p, k_big = jax.random.split(key, 3)

    # Small shapes consistent with the module.
    batch = 2
    input_size = 8
    hidden_size = 32

    x = jax.random.normal(k_x, (batch, input_size), dtype=jnp.float32)
    params = init_params(k_p, input_size, hidden_size)
    prepped = prepare_params(params)          # one-time parameter prep (cached)

    out = jax.block_until_ready(policy_network_forward(x, prepped))
    ref = policy_network_reference(x, params)

    assert out.shape == (batch, 3)
    assert jnp.allclose(jnp.sum(out, axis=-1), 1.0, atol=1e-2)
    assert jnp.allclose(out, ref, atol=5e-2)

    # Multi-tile grid path (>=2 grid steps -> megacore sharding on v7x).
    x_big = jax.random.normal(k_big, (1024, input_size), dtype=jnp.float32)
    out_big = jax.block_until_ready(policy_network_forward(x_big, prepped))
    ref_big = policy_network_reference(x_big, params)
    assert out_big.shape == (1024, 3)
    assert jnp.allclose(jnp.sum(out_big, axis=-1), 1.0, atol=1e-2)
    assert jnp.allclose(out_big, ref_big, atol=5e-2)

    print("KERNEL_OK")
</pallas_src>

<mosaic_0001>
module attributes {stable_mosaic.version = 11 : i64} {
  func.func @_policy_mlp_kernel(%arg0: i32, %arg1: memref<128x8xf32, #tpu.memory_space<vmem>>, %arg2: memref<8x128xbf16, #tpu.memory_space<vmem>>, %arg3: memref<1x128xf32, #tpu.memory_space<vmem>>, %arg4: memref<128x128xbf16, #tpu.memory_space<vmem>>, %arg5: memref<1x128xf32, #tpu.memory_space<vmem>>, %arg6: memref<8x128xbf16, #tpu.memory_space<vmem>>, %arg7: memref<8x1xf32, #tpu.memory_space<vmem>>, %arg8: memref<8x128xf32, #tpu.memory_space<vmem>>) attributes {dimension_semantics = [#tpu.dimension_semantics<parallel>], iteration_bounds = array<i64: 1>, scalar_prefetch = 0 : i64, scratch_operands = 0 : i64, tpu.core_type = #tpu.core_type<tc>, window_params = [{transform_indices = @transform_0, window_bounds = array<i64: 128, 8>}, {pipeline_mode = #tpu.pipeline_mode<synchronous>, transform_indices = @transform_1, window_bounds = array<i64: 8, 128>}, {pipeline_mode = #tpu.pipeline_mode<synchronous>, transform_indices = @transform_2, window_bounds = array<i64: 1, 128>}, {pipeline_mode = #tpu.pipeline_mode<synchronous>, transform_indices = @transform_3, window_bounds = array<i64: 128, 128>}, {pipeline_mode = #tpu.pipeline_mode<synchronous>, transform_indices = @transform_4, window_bounds = array<i64: 1, 128>}, {pipeline_mode = #tpu.pipeline_mode<synchronous>, transform_indices = @transform_5, window_bounds = array<i64: 8, 128>}, {pipeline_mode = #tpu.pipeline_mode<synchronous>, transform_indices = @transform_6, window_bounds = array<i64: 8, 1>}, {transform_indices = @transform_7, window_bounds = array<i64: 8, 128>}]} {
    %c0 = arith.constant 0 : index
    %c0_0 = arith.constant 0 : index
    %0 = vector.load %arg1[%c0, %c0_0] : memref<128x8xf32, #tpu.memory_space<vmem>>, vector<128x8xf32>
    %1 = arith.truncf %0 : vector<128x8xf32> to vector<128x8xbf16>
    %c0_1 = arith.constant 0 : index
    %c0_2 = arith.constant 0 : index
    %2 = vector.load %arg2[%c0_1, %c0_2] : memref<8x128xbf16, #tpu.memory_space<vmem>>, vector<8x128xbf16>
    %cst = arith.constant dense<0.000000e+00> : vector<128x128xf32>
    %3 = tpu.matmul %1, %2, %cst {dimension_numbers = #tpu.dot_dimension_numbers<[1], [0], [0], [1], [0, 0, 1, 1], [], []>} : vector<128x8xbf16>, vector<8x128xbf16>, vector<128x128xf32> -> vector<128x128xf32>
    %c0_3 = arith.constant 0 : index
    %c0_4 = arith.constant 0 : index
    %4 = vector.load %arg3[%c0_3, %c0_4] : memref<1x128xf32, #tpu.memory_space<vmem>>, vector<1x128xf32>
    %5 = vector.broadcast %4 : vector<1x128xf32> to vector<128x128xf32>
    %6 = arith.addf %3, %5 : vector<128x128xf32>
    %cst_5 = arith.constant 0.000000e+00 : f32
    %7 = vector.broadcast %cst_5 : f32 to vector<128x128xf32>
    %8 = arith.maximumf %6, %7 : vector<128x128xf32>
    %9 = arith.truncf %8 : vector<128x128xf32> to vector<128x128xbf16>
    %c0_6 = arith.constant 0 : index
    %c0_7 = arith.constant 0 : index
    %10 = vector.load %arg4[%c0_6, %c0_7] : memref<128x128xbf16, #tpu.memory_space<vmem>>, vector<128x128xbf16>
    %cst_8 = arith.constant dense<0.000000e+00> : vector<128x128xf32>
    %11 = tpu.matmul %9, %10, %cst_8 {dimension_numbers = #tpu.dot_dimension_numbers<[1], [0], [0], [1], [0, 0, 1, 1], [], []>} : vector<128x128xbf16>, vector<128x128xbf16>, vector<128x128xf32> -> vector<128x128xf32>
    %c0_9 = arith.constant 0 : index
    %c0_10 = arith.constant 0 : index
    %12 = vector.load %arg5[%c0_9, %c0_10] : memref<1x128xf32, #tpu.memory_space<vmem>>, vector<1x128xf32>
    %13 = vector.broadcast %12 : vector<1x128xf32> to vector<128x128xf32>
    %14 = arith.addf %11, %13 : vector<128x128xf32>
    %cst_11 = arith.constant 0.000000e+00 : f32
    %15 = vector.broadcast %cst_11 : f32 to vector<128x128xf32>
    %16 = arith.maximumf %14, %15 : vector<128x128xf32>
    %c0_12 = arith.constant 0 : index
    %c0_13 = arith.constant 0 : index
    %17 = vector.load %arg6[%c0_12, %c0_13] : memref<8x128xbf16, #tpu.memory_space<vmem>>, vector<8x128xbf16>
    %18 = arith.truncf %16 : vector<128x128xf32> to vector<128x128xbf16>
    %cst_14 = arith.constant dense<0.000000e+00> : vector<8x128xf32>
    %19 = tpu.matmul %17, %18, %cst_14 {dimension_numbers = #tpu.dot_dimension_numbers<[1], [1], [0], [0], [0, 0, 1, 0], [], []>} : vector<8x128xbf16>, vector<128x128xbf16>, vector<8x128xf32> -> vector<8x128xf32>
    %c0_15 = arith.constant 0 : index
    %c0_16 = arith.constant 0 : index
    %20 = vector.load %arg7[%c0_15, %c0_16] : memref<8x1xf32, #tpu.memory_space<vmem>>, vector<8x1xf32>
    %21 = vector.broadcast %20 : vector<8x1xf32> to vector<8x128xf32>
    %22 = arith.addf %19, %21 : vector<8x128xf32>
    %cst_17 = arith.constant dense<0xFF800000> : vector<128xf32>
    %23 = vector.multi_reduction <maximumf>, %22, %cst_17 [0] : vector<8x128xf32> to vector<128xf32>
    %24 = vector.shape_cast %23 : vector<128xf32> to vector<1x128xf32>
    %25 = vector.broadcast %24 : vector<1x128xf32> to vector<8x128xf32>
    %26 = arith.subf %22, %25 : vector<8x128xf32>
    %27 = math.exp %26 : vector<8x128xf32>
    %cst_18 = arith.constant dense<0.000000e+00> : vector<128xf32>
    %28 = vector.multi_reduction <add>, %27, %cst_18 [0] : vector<8x128xf32> to vector<128xf32>
    %29 = vector.shape_cast %28 : vector<128xf32> to vector<1x128xf32>
    %30 = tpu.reciprocal %29 {approx = true} : vector<1x128xf32> -> vector<1x128xf32>
    %31 = vector.broadcast %30 : vector<1x128xf32> to vector<8x128xf32>
    %32 = arith.mulf %27, %31 : vector<8x128xf32>
    %c0_19 = arith.constant 0 : index
    %c0_20 = arith.constant 0 : index
    %33 = vector.load %arg8[%c0_19, %c0_20] : memref<8x128xf32, #tpu.memory_space<vmem>>, vector<8x128xf32>
    tpu.vector_store %arg8[%c0_19, %c0_20], %32 {strides = array<i32>} : memref<8x128xf32, #tpu.memory_space<vmem>>, vector<8x128xf32>,
    return
  }
  func.func @transform_0(%arg0: i32) -> (i32, i32) {
    %c0_i32 = arith.constant 0 : i32
    %c0_i32_0 = arith.constant 0 : i32
    return %arg0, %c0_i32 : i32, i32
  }
  func.func @transform_1(%arg0: i32) -> (i32, i32) {
    %c0_i32 = arith.constant 0 : i32
    %c0_i32_0 = arith.constant 0 : i32
    %c0_i32_1 = arith.constant 0 : i32
    return %c0_i32, %c0_i32_0 : i32, i32
  }
  func.func @transform_2(%arg0: i32) -> (i32, i32) {
    %c0_i32 = arith.constant 0 : i32
    %c0_i32_0 = arith.constant 0 : i32
    %c0_i32_1 = arith.constant 0 : i32
    return %c0_i32, %c0_i32_0 : i32, i32
  }
  func.func @transform_3(%arg0: i32) -> (i32, i32) {
    %c0_i32 = arith.constant 0 : i32
    %c0_i32_0 = arith.constant 0 : i32
    %c0_i32_1 = arith.constant 0 : i32
    return %c0_i32, %c0_i32_0 : i32, i32
  }
  func.func @transform_4(%arg0: i32) -> (i32, i32) {
    %c0_i32 = arith.constant 0 : i32
    %c0_i32_0 = arith.constant 0 : i32
    %c0_i32_1 = arith.constant 0 : i32
    return %c0_i32, %c0_i32_0 : i32, i32
  }
  func.func @transform_5(%arg0: i32) -> (i32, i32) {
    %c0_i32 = arith.constant 0 : i32
    %c0_i32_0 = arith.constant 0 : i32
    %c0_i32_1 = arith.constant 0 : i32
    return %c0_i32, %c0_i32_0 : i32, i32
  }
  func.func @transform_6(%arg0: i32) -> (i32, i32) {
    %c0_i32 = arith.constant 0 : i32
    %c0_i32_0 = arith.constant 0 : i32
    %c0_i32_1 = arith.constant 0 : i32
    return %c0_i32, %c0_i32_0 : i32, i32
  }
  func.func @transform_7(%arg0: i32) -> (i32, i32) {
    %c0_i32 = arith.constant 0 : i32
    %c0_i32_0 = arith.constant 0 : i32
    return %c0_i32, %arg0 : i32, i32
  }
}

</mosaic_0001>

<llo_original>
// kernel: tpu_custom_call.1
$region0: #{tpu_custom_call.1}
  #allocation0 [shape = 'u32[]', space=smem, size = 0x4, offset = 0x4, fixed_abs, tag = 'smem constant byte address 0x4 - core index']
  #allocation1 [shape = 'u32[72,128]{1,0:T(1,128)}', space=vmem, size = 0x9000, scoped, tag = 'internal scratch']
  %s0 = inlined_call_operand.vmem [shape: f32[128,8], index: 0, kind: input, shape index: {}]
  %s1 = inlined_call_operand.vmem [shape: bf16[8,128], index: 1, kind: input, shape index: {}]
  %s2 = inlined_call_operand.vmem [shape: f32[1,128], index: 2, kind: input, shape index: {}]
  %s3 = inlined_call_operand.vmem [shape: bf16[128,128], index: 3, kind: input, shape index: {}]
  %s4 = inlined_call_operand.vmem [shape: f32[1,128], index: 4, kind: input, shape index: {}]
  %s5 = inlined_call_operand.vmem [shape: bf16[8,128], index: 5, kind: input, shape index: {}]
  %s6 = inlined_call_operand.vmem [shape: f32[8,1], index: 6, kind: input, shape index: {}]
  %s7 = inlined_call_operand.hbm [shape: f32[8,128], index: 7, kind: output, shape index: {}]
  %s8 = sld [smem:[#allocation0]]
  $region38: #{tpu_custom_call.1} parent=0
    _
  %s10 = ssub.s32 1, %s8
  %s11 = scalar_select 0, %s10, %s8
  $region1: #{tpu_custom_call.1} parent=0
    #allocation2 [shape = 'u8[4096]{0}', space=vmem, size = 0x1000, scoped, tag = 'output window, operand 0, single buffered']
    #allocation3 [shape = 's32[1]{0}', space=sflag, size = 0x4, scoped, tag = 'scoped memory for tpu_custom_call.1']
    %12 = vsyncpa [#allocation3], 0
    // Predicated region
    $region2: #{tpu_custom_call.1} parent=1 // pred_check
      _
    $region3: #{tpu_custom_call.1} parent=1 // pred_check_branch
      %14 = sbr.rel (0) target = $region5
    $region4: #{tpu_custom_call.1} parent=1 // pred_region
      _
    $region5: #{tpu_custom_call.1} parent=1 // pred_fallthru
      _
    // Predicated region
    $region6: #{tpu_custom_call.1} parent=1 // pred_check
      _
    $region7: #{tpu_custom_call.1} parent=1 // pred_check_branch
      %16 = sbr.rel (0) target = $region9
    $region8: #{tpu_custom_call.1} parent=1 // pred_region
      _
    $region9: #{tpu_custom_call.1} parent=1 // pred_fallthru
      _
    // Predicated region
    $region10: #{tpu_custom_call.1} parent=1 // pred_check
      _
    $region11: #{tpu_custom_call.1} parent=1 // pred_check_branch
      %18 = sbr.rel (0) target = $region13
    $region12: #{tpu_custom_call.1} parent=1 // pred_region
      _
    $region13: #{tpu_custom_call.1} parent=1 // pred_fallthru
      _
    // Predicated region
    $region14: #{tpu_custom_call.1} parent=1 // pred_check
      _
    $region15: #{tpu_custom_call.1} parent=1 // pred_check_branch
      %20 = sbr.rel (0) target = $region17
    $region16: #{tpu_custom_call.1} parent=1 // pred_region
      _
    $region17: #{tpu_custom_call.1} parent=1 // pred_fallthru
      _
    // Predicated region
    $region18: #{tpu_custom_call.1} parent=1 // pred_check
      _
    $region19: #{tpu_custom_call.1} parent=1 // pred_check_branch
      %22 = sbr.rel (0) target = $region21
    $region20: #{tpu_custom_call.1} parent=1 // pred_region
      _
    $region21: #{tpu_custom_call.1} parent=1 // pred_fallthru
      _
    // Predicated region
    $region22: #{tpu_custom_call.1} parent=1 // pred_check
      _
    $region23: #{tpu_custom_call.1} parent=1 // pred_check_branch
      %24 = sbr.rel (0) target = $region25
    $region24: #{tpu_custom_call.1} parent=1 // pred_region
      _
    $region25: #{tpu_custom_call.1} parent=1 // pred_fallthru
      _
    // Predicated region
    $region26: #{tpu_custom_call.1} parent=1 // pred_check
      _
    $region27: #{tpu_custom_call.1} parent=1 // pred_check_branch
      %26 = sbr.rel (0) target = $region29
    $region28: #{tpu_custom_call.1} parent=1 // pred_region
      _
    $region29: #{tpu_custom_call.1} parent=1 // pred_fallthru
      _
    %v28 = vld [vmem:[%s0] sm:$0xff]
    %v29 = vld [vmem:[%s0 + $0x8] sm:$0xff]
    %v30 = vld [vmem:[%s0 + $0x10] sm:$0xff]
    %v31 = vld [vmem:[%s0 + $0x18] sm:$0xff]
    %v32 = vld [vmem:[%s0 + $0x20] sm:$0xff]
    %v33 = vld [vmem:[%s0 + $0x28] sm:$0xff]
    %v34 = vld [vmem:[%s0 + $0x30] sm:$0xff]
    %v35 = vld [vmem:[%s0 + $0x38] sm:$0xff]
    %v36 = vld [vmem:[%s0 + $0x40] sm:$0xff]
    %v37 = vld [vmem:[%s0 + $0x48] sm:$0xff]
    %v38 = vld [vmem:[%s0 + $0x50] sm:$0xff]
    %v39 = vld [vmem:[%s0 + $0x58] sm:$0xff]
    %v40 = vld [vmem:[%s0 + $0x60] sm:$0xff]
    %v41 = vld [vmem:[%s0 + $0x68] sm:$0xff]
    %v42 = vld [vmem:[%s0 + $0x70] sm:$0xff]
    %v43 = vld [vmem:[%s0 + $0x78] sm:$0xff]
    %v44 = vpack.c.bf16 %v29, %v28
    %v45 = vpack.c.bf16 %v31, %v30
    %v46 = vpack.c.bf16 %v33, %v32
    %v47 = vpack.c.bf16 %v35, %v34
    %v48 = vpack.c.bf16 %v37, %v36
    %v49 = vpack.c.bf16 %v39, %v38
    %v50 = vpack.c.bf16 %v41, %v40
    %v51 = vpack.c.bf16 %v43, %v42
    %v52 = vld [vmem:[%s1] sm:$0xf]
    %v53 = vld [vmem:[%s2] sm:$0x1]
    %v55 = vperm.slane %v53, 0
    %vm57 = vcmask 64512
    %v59 = vsel %vm57, %v44, 0
    %v62 = vsel %vm57, %v45, 0
    %v65 = vsel %vm57, %v46, 0
    %v68 = vsel %vm57, %v47, 0
    %v71 = vsel %vm57, %v48, 0
    %v74 = vsel %vm57, %v49, 0
    %v77 = vsel %vm57, %v50, 0
    %v80 = vsel %vm57, %v51, 0
    %vm82 = vcmask 1043456
    %v84 = vsel %vm82, %v52, 0
    %86 = vmatpush.bf16.msra.mxu0 0
    %87 = vmatpush.bf16.msra.mxu0 0
    %88 = vmatpush.bf16.msra.mxu0 0
    %89 = vmatpush.bf16.msra.mxu0 0
    %90 = vmatpush.bf16.msra.mxu0 0
    %91 = vmatpush.bf16.msra.mxu0 0
    %92 = vmatpush.bf16.msra.mxu0 0
    %93 = vmatpush.bf16.msra.mxu0 %v84
    %94 = vmatmul.bf16.gmra.mxu0 %v59
    %v95 = vpop.f32.mrf.mxu0
    %v96 = vadd.f32 %v55, %v95
    %v97 = vpop.f32.mrf.mxu0
    %v98 = vadd.f32 %v55, %v97
    %99 = vmatmul.bf16.gmra.mxu0 %v62
    %v100 = vpop.f32.mrf.mxu0
    %v101 = vadd.f32 %v55, %v100
    %v102 = vpop.f32.mrf.mxu0
    %v103 = vadd.f32 %v55, %v102
    %104 = vmatmul.bf16.gmra.mxu0 %v65
    %v105 = vpop.f32.mrf.mxu0
    %v106 = vadd.f32 %v55, %v105
    %v107 = vpop.f32.mrf.mxu0
    %v108 = vadd.f32 %v55, %v107
    %109 = vmatmul.bf16.gmra.mxu0 %v68
    %v110 = vpop.f32.mrf.mxu0
    %v111 = vadd.f32 %v55, %v110
    %v112 = vpop.f32.mrf.mxu0
    %v113 = vadd.f32 %v55, %v112
    %114 = vmatmul.bf16.gmra.mxu0 %v71
    %v115 = vpop.f32.mrf.mxu0
    %v116 = vadd.f32 %v55, %v115
    %v117 = vpop.f32.mrf.mxu0
    %v118 = vadd.f32 %v55, %v117
    %119 = vmatmul.bf16.gmra.mxu0 %v74
    %v120 = vpop.f32.mrf.mxu0
    %v121 = vadd.f32 %v55, %v120
    %v122 = vpop.f32.mrf.mxu0
    %v123 = vadd.f32 %v55, %v122
    %124 = vmatmul.bf16.gmra.mxu0 %v77
    %v125 = vpop.f32.mrf.mxu0
    %v126 = vadd.f32 %v55, %v125
    %v127 = vpop.f32.mrf.mxu0
    %v128 = vadd.f32 %v55, %v127
    %129 = vmatmul.bf16.gmra.mxu0 %v80
    %v130 = vpop.f32.mrf.mxu0
    %v131 = vadd.f32 %v55, %v130
    %v132 = vpop.f32.mrf.mxu0
    %v133 = vadd.f32 %v55, %v132
    %134 = vdwg.mxu0
    %v135 = vmax.f32 %v96, 0.0
    %v136 = vmax.f32 %v98, 0.0
    %v137 = vmax.f32 %v101, 0.0
    %v138 = vmax.f32 %v103, 0.0
    %v139 = vmax.f32 %v106, 0.0
    %v140 = vmax.f32 %v108, 0.0
    %v141 = vmax.f32 %v111, 0.0
    %v142 = vmax.f32 %v113, 0.0
    %v143 = vmax.f32 %v116, 0.0
    %v144 = vmax.f32 %v118, 0.0
    %v145 = vmax.f32 %v121, 0.0
    %v146 = vmax.f32 %v123, 0.0
    %v147 = vmax.f32 %v126, 0.0
    %v148 = vmax.f32 %v128, 0.0
    %v149 = vmax.f32 %v131, 0.0
    %v150 = vmax.f32 %v133, 0.0
    %v151 = vpack.c.bf16 %v136, %v135
    %v152 = vpack.c.bf16 %v138, %v137
    %v153 = vpack.c.bf16 %v140, %v139
    %v154 = vpack.c.bf16 %v142, %v141
    %v155 = vpack.c.bf16 %v144, %v143
    %v156 = vpack.c.bf16 %v146, %v145
    %v157 = vpack.c.bf16 %v148, %v147
    %v158 = vpack.c.bf16 %v150, %v149
    %v159 = vld [vmem:[%s3] sm:$0xf]
    %v160 = vld [vmem:[%s3 + $0x4] sm:$0xf]
    %v161 = vld [vmem:[%s3 + $0x8] sm:$0xf]
    %v162 = vld [vmem:[%s3 + $0xc] sm:$0xf]
    %v163 = vld [vmem:[%s3 + $0x10] sm:$0xf]
    %v164 = vld [vmem:[%s3 + $0x14] sm:$0xf]
    %v165 = vld [vmem:[%s3 + $0x18] sm:$0xf]
    %v166 = vld [vmem:[%s3 + $0x1c] sm:$0xf]
    %v167 = vld [vmem:[%s3 + $0x20] sm:$0xf]
    %v168 = vld [vmem:[%s3 + $0x24] sm:$0xf]
    %v169 = vld [vmem:[%s3 + $0x28] sm:$0xf]
    %v170 = vld [vmem:[%s3 + $0x2c] sm:$0xf]
    %v171 = vld [vmem:[%s3 + $0x30] sm:$0xf]
    %v172 = vld [vmem:[%s3 + $0x34] sm:$0xf]
    %v173 = vld [vmem:[%s3 + $0x38] sm:$0xf]
    %v174 = vld [vmem:[%s3 + $0x3c] sm:$0xf]
    %v175 = vld [vmem:[%s4] sm:$0x1]
    %v177 = vperm.slane %v175, 0
    %v195 = vunpack.c.l.b16 %v159
    %v196 = vunpack.c.l.b16 %v160
    %v197 = vunpack.c.l.b16 %v161
    %v198 = vunpack.c.l.b16 %v162
    %v199 = vunpack.c.l.b16 %v163
    %v200 = vunpack.c.l.b16 %v164
    %v201 = vunpack.c.l.b16 %v165
    %v202 = vunpack.c.l.b16 %v166
    %v203 = vunpack.c.l.b16 %v167
    %v204 = vunpack.c.l.b16 %v168
    %v205 = vunpack.c.l.b16 %v169
    %v206 = vunpack.c.l.b16 %v170
    %v207 = vunpack.c.l.b16 %v171
    %v208 = vunpack.c.l.b16 %v172
    %v209 = vunpack.c.l.b16 %v173
    %v210 = vunpack.c.l.b16 %v174
    %v211 = vpack.c.b16 %v196, %v195
    %v212 = vpack.c.b16 %v198, %v197
    %v213 = vpack.c.b16 %v200, %v199
    %v214 = vpack.c.b16 %v202, %v201
    %v215 = vpack.c.b16 %v204, %v203
    %v216 = vpack.c.b16 %v206, %v205
    %v217 = vpack.c.b16 %v208, %v207
    %v218 = vpack.c.b16 %v210, %v209
    %227 = vmatpush.bf16.msra.mxu0 %v218
    %228 = vmatpush.bf16.msra.mxu0 %v217
    %229 = vmatpush.bf16.msra.mxu0 %v216
    %230 = vmatpush.bf16.msra.mxu0 %v215
    %231 = vmatpush.bf16.msra.mxu0 %v214
    %232 = vmatpush.bf16.msra.mxu0 %v213
    %233 = vmatpush.bf16.msra.mxu0 %v212
    %234 = vmatpush.bf16.msra.mxu0 %v211
    %235 = vmatmul.bf16.gmra.mxu0 %v151
    %v236 = vpop.f32.mrf.mxu0
    %v237 = vadd.f32 %v177, %v236
    %v238 = vpop.f32.mrf.mxu0
    %v239 = vadd.f32 %v177, %v238
    %240 = vmatmul.bf16.gmra.mxu0 %v152
    %v241 = vpop.f32.mrf.mxu0
    %v242 = vadd.f32 %v177, %v241
    %v243 = vpop.f32.mrf.mxu0
    %v244 = vadd.f32 %v177, %v243
    %245 = vmatmul.bf16.gmra.mxu0 %v153
    %v246 = vpop.f32.mrf.mxu0
    %v247 = vadd.f32 %v177, %v246
    %v248 = vpop.f32.mrf.mxu0
    %v249 = vadd.f32 %v177, %v248
    %250 = vmatmul.bf16.gmra.mxu0 %v154
    %v251 = vpop.f32.mrf.mxu0
    %v252 = vadd.f32 %v177, %v251
    %v253 = vpop.f32.mrf.mxu0
    %v254 = vadd.f32 %v177, %v253
    %255 = vmatmul.bf16.gmra.mxu0 %v155
    %v256 = vpop.f32.mrf.mxu0
    %v257 = vadd.f32 %v177, %v256
    %v258 = vpop.f32.mrf.mxu0
    %v259 = vadd.f32 %v177, %v258
    %260 = vmatmul.bf16.gmra.mxu0 %v156
    %v261 = vpop.f32.mrf.mxu0
    %v262 = vadd.f32 %v177, %v261
    %v263 = vpop.f32.mrf.mxu0
    %v264 = vadd.f32 %v177, %v263
    %265 = vmatmul.bf16.gmra.mxu0 %v157
    %v266 = vpop.f32.mrf.mxu0
    %v267 = vadd.f32 %v177, %v266
    %v268 = vpop.f32.mrf.mxu0
    %v269 = vadd.f32 %v177, %v268
    %270 = vmatmul.bf16.gmra.mxu0 %v158
    %v271 = vpop.f32.mrf.mxu0
    %v272 = vadd.f32 %v177, %v271
    %v273 = vpop.f32.mrf.mxu0
    %v274 = vadd.f32 %v177, %v273
    %275 = vdwg.mxu0
    %v276 = vmax.f32 %v237, 0.0
    %v277 = vmax.f32 %v239, 0.0
    %v278 = vmax.f32 %v242, 0.0
    %v279 = vmax.f32 %v244, 0.0
    %v280 = vmax.f32 %v247, 0.0
    %v281 = vmax.f32 %v249, 0.0
    %v282 = vmax.f32 %v252, 0.0
    %v283 = vmax.f32 %v254, 0.0
    %v284 = vmax.f32 %v257, 0.0
    %v285 = vmax.f32 %v259, 0.0
    %v286 = vmax.f32 %v262, 0.0
    %v287 = vmax.f32 %v264, 0.0
    %v288 = vmax.f32 %v267, 0.0
    %v289 = vmax.f32 %v269, 0.0
    %v290 = vmax.f32 %v272, 0.0
    %v291 = vmax.f32 %v274, 0.0
    %v292 = vld [vmem:[%s5] sm:$0xf]
    %v293 = vpack.c.bf16 %v277, %v276
    %v294 = vpack.c.bf16 %v279, %v278
    %v295 = vpack.c.bf16 %v281, %v280
    %v296 = vpack.c.bf16 %v283, %v282
    %v297 = vpack.c.bf16 %v285, %v284
    %v298 = vpack.c.bf16 %v287, %v286
    %v299 = vpack.c.bf16 %v289, %v288
    %v300 = vpack.c.bf16 %v291, %v290
    %v301 = vld [vmem:[%s6] sm:$0xff]
    %303 = vset.pattern.permute.xlu0 0
    %304 = vperm.xlu0 %303, %v301
    %v305 = vpop.permute.xlu0 %304
    %307 = vmatpush.bf16.xpose.msra.mxu0 %v300
    %308 = vmatpush.bf16.xpose.msra.mxu0 %v299
    %309 = vmatpush.bf16.xpose.msra.mxu0 %v298
    %310 = vmatpush.bf16.xpose.msra.mxu0 %v297
    %311 = vmatpush.bf16.xpose.msra.mxu0 %v296
    %312 = vmatpush.bf16.xpose.msra.mxu0 %v295
    %313 = vmatpush.bf16.xpose.msra.mxu0 %v294
    %314 = vmatpush.bf16.xpose.msra.mxu0 %v293
    %315 = vmatmul.bf16.gmra.mxu0 %v292
    %v316 = vpop.f32.mrf.mxu0
    %v317 = vadd.f32 %v305, %v316
    %v318 = vpop.f32.mrf.mxu0
    %319 = vdwg.mxu0
    %v320 = vrot.slane %v317, 4
    %v321 = vmax.f32 %v317, %v320
    %v322 = vrot.slane %v321, 2
    %v323 = vmax.f32 %v321, %v322
    %v324 = vrot.slane %v323, 1
    %v325 = vmax.f32 %v323, %v324
    %v326 = vsub.f32 %v317, %v325
    %v327 = vmul.f32 %v326, 1.442695
    %v328 = vpow.pop %v327
    %v329 = vrot.slane %v328, 4
    %v330 = vadd.f32 %v328, %v329
    %v331 = vrot.slane %v330, 2
    %v332 = vadd.f32 %v330, %v331
    %v333 = vrot.slane %v332, 1
    %v334 = vadd.f32 %v332, %v333
    %v335 = vrcp.pop %v334
    %v336 = vmul.f32 %v328, %v335
    %337 = vst [vmem:[#allocation2] sm:$0xff] %v336
    // Predicated region
    $region30: #{tpu_custom_call.1} parent=1 // pred_check
      _
    $region31: #{tpu_custom_call.1} parent=1 // pred_check_branch
      %339 = sbr.rel (0) target = $region33
    $region32: #{tpu_custom_call.1} parent=1 // pred_region
      %341 = vsyncadd [#allocation3], 0
      %s343 = sshll.u32 [#allocation2], 4
      %s344 = int_to_ptr.vmem [resolvable:$true] %s343
      %s345 = sshll.u32 %s7, 4
      %s346 = int_to_ptr.hbm [resolvable:$true] %s345
      %348 = dma.vmem_to_hbm [thread:$0]  %s344, 128, %s346, [#allocation3]
    $region33: #{tpu_custom_call.1} parent=1 // pred_fallthru
      _
    // Predicated region
    $region34: #{tpu_custom_call.1} parent=1 // pred_check
      _
    $region35: #{tpu_custom_call.1} parent=1 // pred_check_branch
      %350 = sbr.rel (0) target = $region37
    $region36: #{tpu_custom_call.1} parent=1 // pred_region
      %352 = dma.done [#allocation3], 128
    $region37: #{tpu_custom_call.1} parent=1 // pred_fallthru
      _
    %353 = vsyncpa [#allocation3], 1

</llo_original>
